<compile_context>
chip_gen: v5e
topology: v5e:2x2
jax: 0.10.0
libtpu: 0.0.40
codegen_flags: <defaults>
</compile_context>

<pallas_src>
import functools

import jax
import jax.numpy as jnp
from jax import lax
from jax.experimental import pallas as pl
from jax.experimental.pallas import tpu as pltpu

CLIP_MIN = 1.0 / 1024.0
CLIP_MAX = 1.0
LANES = 128
BLOCK_ROWS_CAP = 4096   # 4096 x 128 f32 = 2 MiB per input tile
CHUNK_ROWS = 512        # in-kernel sub-chunk (bounds VMEM temporaries)


def _clipped_terms(m, s, t, z):
    """Elementwise math shared by the kernel and the jnp tail path (f32)."""
    diff = m - t                    # mu - target
    sigma_gt = jnp.abs(diff)        # |mu - target|
    main = jnp.clip(jnp.abs(diff + sigma_gt * z), CLIP_MIN, CLIP_MAX)
    aux = jnp.clip(jnp.abs(s - t), CLIP_MIN, CLIP_MAX)
    return main, aux


def _tpu_kind():
    try:
        return jax.devices()[0].device_kind.lower()
    except Exception:
        return ""


def ssl1_loss_train_pallas(mu, sigma, target, z, alpha, loss_weight=1.0):
    """All inputs same shape (e.g. NCHW). Returns scalar loss (float32)."""
    assert mu.shape == sigma.shape == target.shape == z.shape
    n_elem = int(mu.size)
    dtype_bytes = jnp.dtype(mu.dtype).itemsize

    # ---- static tiling config (all Python ints) -----------------------------
    rows_avail = n_elem // LANES
    block_rows = min(BLOCK_ROWS_CAP, (rows_avail // 8) * 8)   # multiple of 8
    blk_elems = block_rows * LANES
    n_blocks = (n_elem // blk_elems) if block_rows >= 8 else 0

    kind = _tpu_kind()
    is_v7 = "v7" in kind
    # Megacore split only on v7x (2 TensorCores per chip); waste on v5e/v6e.
    if is_v7 and n_blocks >= 2:
        num_slices = 2
        n_blocks -= n_blocks % 2      # an odd leftover block joins the jnp tail
    else:
        num_slices = 1

    bulk = n_blocks * blk_elems if n_blocks else 0
    tail = n_elem - bulk
    steps = n_blocks // num_slices if n_blocks else 0

    # ---- flatten (contiguous collapse only — no padding, no copies) ---------
    mu_f = mu.reshape(-1)
    sg_f = sigma.reshape(-1)
    tg_f = target.reshape(-1)
    z_f = z.reshape(-1)

    main_sum = jnp.float32(0.0)
    aux_sum = jnp.float32(0.0)

    if bulk:
        chunk_rows = CHUNK_ROWS if block_rows % CHUNK_ROWS == 0 else block_rows
        n_chunks = block_rows // chunk_rows

        def kernel(mu_ref, sg_ref, tg_ref, z_ref, out_ref, main_acc, aux_acc):
            i = pl.program_id(1)

            @pl.when(i == 0)
            def _():
                main_acc[...] = jnp.zeros_like(main_acc)
                aux_acc[...] = jnp.zeros_like(aux_acc)

            def accumulate_chunk(off):
                sl = pl.ds(off, chunk_rows)
                m = mu_ref[sl, :].astype(jnp.float32)
                s = sg_ref[sl, :].astype(jnp.float32)
                t = tg_ref[sl, :].astype(jnp.float32)
                zz = z_ref[sl, :].astype(jnp.float32)
                main, aux = _clipped_terms(m, s, t, zz)
                # Per-lane/sublane partial sums: pure VPU adds, no XLU work.
                main_acc[...] += main.reshape(-1, 8, LANES).sum(axis=0)
                aux_acc[...] += aux.reshape(-1, 8, LANES).sum(axis=0)

            if n_chunks == 1:
                accumulate_chunk(0)
            else:
                # Sub-chunk loop keeps elementwise temporaries small in VMEM.
                def body(c, carry):
                    accumulate_chunk(pl.multiple_of(c * chunk_rows, chunk_rows))
                    return carry
                lax.fori_loop(0, n_chunks, body, 0)

            @pl.when(i == pl.num_programs(1) - 1)
            def _():
                out_ref[0, 0, :, :] = main_acc[...]
                out_ref[0, 1, :, :] = aux_acc[...]

        in_spec = pl.BlockSpec((block_rows, LANES),
                               lambda p, i: (p * steps + i, 0))
        out_spec = pl.BlockSpec((1, 2, 8, LANES), lambda p, i: (p, 0, 0, 0))

        def as2d(x):
            # Largest block-aligned prefix: reshape only, no jnp.pad copy.
            return x[:bulk].reshape(n_blocks * block_rows, LANES)

        out = pl.pallas_call(
            kernel,
            out_shape=jax.ShapeDtypeStruct((num_slices, 2, 8, LANES),
                                           jnp.float32),
            grid_spec=pltpu.PrefetchScalarGridSpec(
                num_scalar_prefetch=0,
                grid=(num_slices, steps),
                in_specs=[in_spec] * 4,
                out_specs=out_spec,
                scratch_shapes=[pltpu.VMEM((8, LANES), jnp.float32),
                                pltpu.VMEM((8, LANES), jnp.float32)],
            ),
            compiler_params=pltpu.CompilerParams(
                dimension_semantics=("parallel", "arbitrary"),
                vmem_limit_bytes=(48 << 20) if is_v7 else (64 << 20)),
            cost_estimate=pl.CostEstimate(
                flops=12 * bulk,
                transcendentals=0,
                bytes_accessed=4 * bulk * dtype_bytes
                + num_slices * 2 * 8 * LANES * 4),
        )(as2d(mu_f), as2d(sg_f), as2d(tg_f), as2d(z_f))

        main_sum = jnp.sum(out[:, 0])
        aux_sum = jnp.sum(out[:, 1])

    if tail:
        # Small (< one block) remainder: fused plain-jnp partial sums.
        main_t, aux_t = _clipped_terms(
            mu_f[bulk:].astype(jnp.float32), sg_f[bulk:].astype(jnp.float32),
            tg_f[bulk:].astype(jnp.float32), z_f[bulk:].astype(jnp.float32))
        main_sum = main_sum + jnp.sum(main_t)
        aux_sum = aux_sum + jnp.sum(aux_t)

    inv_n = jnp.float32(1.0 / n_elem)
    return (jnp.asarray(loss_weight, jnp.float32)
            * (main_sum * inv_n
               + jnp.asarray(alpha, jnp.float32) * (aux_sum * inv_n)))


def ssl1_loss_train_ref(mu, sigma, target, z, alpha, loss_weight=1.0):
    """Pure-JAX reference mirroring the PyTorch code."""
    mu, sigma, target, z = (a.astype(jnp.float32) for a in (mu, sigma, target, z))
    sigma_gt = jnp.abs(mu - target)
    loss_main = jnp.mean(jnp.clip(jnp.abs(mu + sigma_gt * z - target),
                                  CLIP_MIN, CLIP_MAX))
    loss_aux = jnp.mean(jnp.clip(jnp.abs(sigma - target), CLIP_MIN, CLIP_MAX))
    return loss_weight * (loss_main + alpha * loss_aux)


if __name__ == "__main__":
    key = jax.random.PRNGKey(0)

    # TODO(synk): the PyTorch module draws z = torch.randn(...) inside the loss;
    # here z is drawn with jax.random in the caller and passed in (detached
    # noise), which keeps the kernel deterministic and testable.
    alpha = 0.5        # `weight` argument of forward() -> alpha of ssl1train_loss
    loss_weight = 1.0  # module default

    loss_fn = jax.jit(functools.partial(ssl1_loss_train_pallas,
                                        alpha=alpha, loss_weight=loss_weight))

    shapes = [
        (2, 4, 16, 16),   # block-aligned: pure kernel path
        (2, 4, 20, 16),   # kernel bulk + small jnp tail
        (1, 3, 17, 19),   # smaller than one block: pure tail path
    ]
    for shape in shapes:
        k_mu, k_sigma, k_tgt, k_z, key = jax.random.split(key, 5)
        mu = jax.random.normal(k_mu, shape, dtype=jnp.float32)
        sigma = jax.random.normal(k_sigma, shape, dtype=jnp.float32)
        target = jax.random.normal(k_tgt, shape, dtype=jnp.float32)
        z = jax.random.normal(k_z, shape, dtype=jnp.float32)

        loss = jax.block_until_ready(loss_fn(mu, sigma, target, z))
        ref = ssl1_loss_train_ref(mu, sigma, target, z, alpha, loss_weight)
        assert jnp.allclose(loss, ref, rtol=1e-5, atol=1e-6), \
            (shape, float(loss), float(ref))

    print("KERNEL_OK")
</pallas_src>

<mosaic_0001>
module attributes {stable_mosaic.version = 11 : i64} {
  func.func @kernel(%arg0: i32, %arg1: i32, %arg2: memref<16x128xf32, #tpu.memory_space<vmem>>, %arg3: memref<16x128xf32, #tpu.memory_space<vmem>>, %arg4: memref<16x128xf32, #tpu.memory_space<vmem>>, %arg5: memref<16x128xf32, #tpu.memory_space<vmem>>, %arg6: memref<1x2x8x128xf32, #tpu.memory_space<vmem>>, %arg7: memref<8x128xf32, #tpu.memory_space<vmem>>, %arg8: memref<8x128xf32, #tpu.memory_space<vmem>>) attributes {dimension_semantics = [#tpu.dimension_semantics<parallel>, #tpu.dimension_semantics<arbitrary>], iteration_bounds = array<i64: 1, 1>, scalar_prefetch = 0 : i64, scratch_operands = 2 : i64, tpu.core_type = #tpu.core_type<tc>, window_params = [{transform_indices = @transform_0, window_bounds = array<i64: 16, 128>}, {transform_indices = @transform_1, window_bounds = array<i64: 16, 128>}, {transform_indices = @transform_2, window_bounds = array<i64: 16, 128>}, {transform_indices = @transform_3, window_bounds = array<i64: 16, 128>}, {transform_indices = @transform_4, window_bounds = array<i64: 1, 2, 8, 128>}]} {
    %c0_i32 = arith.constant 0 : i32
    %0 = arith.cmpi eq, %arg1, %c0_i32 : i32
    %1 = arith.extui %0 : i1 to i32
    %c0_i32_0 = arith.constant 0 : i32
    %2 = arith.cmpi ne, %1, %c0_i32_0 : i32
    scf.if %2 {
      %cst_23 = arith.constant 0.000000e+00 : f32
      %35 = vector.broadcast %cst_23 : f32 to vector<8x128xf32>
      %c0_24 = arith.constant 0 : index
      %c0_25 = arith.constant 0 : index
      %36 = vector.load %arg7[%c0_24, %c0_25] : memref<8x128xf32, #tpu.memory_space<vmem>>, vector<8x128xf32>
      tpu.vector_store %arg7[%c0_24, %c0_25], %35 {strides = array<i32>} : memref<8x128xf32, #tpu.memory_space<vmem>>, vector<8x128xf32>,
      %cst_26 = arith.constant 0.000000e+00 : f32
      %37 = vector.broadcast %cst_26 : f32 to vector<8x128xf32>
      %c0_27 = arith.constant 0 : index
      %c0_28 = arith.constant 0 : index
      %38 = vector.load %arg8[%c0_27, %c0_28] : memref<8x128xf32, #tpu.memory_space<vmem>>, vector<8x128xf32>
      tpu.vector_store %arg8[%c0_27, %c0_28], %37 {strides = array<i32>} : memref<8x128xf32, #tpu.memory_space<vmem>>, vector<8x128xf32>,
    } else {
    }
    %c0 = arith.constant 0 : index
    %c0_1 = arith.constant 0 : index
    %3 = vector.load %arg2[%c0, %c0_1] : memref<16x128xf32, #tpu.memory_space<vmem>>, vector<16x128xf32>
    %c0_2 = arith.constant 0 : index
    %c0_3 = arith.constant 0 : index
    %4 = vector.load %arg3[%c0_2, %c0_3] : memref<16x128xf32, #tpu.memory_space<vmem>>, vector<16x128xf32>
    %c0_4 = arith.constant 0 : index
    %c0_5 = arith.constant 0 : index
    %5 = vector.load %arg4[%c0_4, %c0_5] : memref<16x128xf32, #tpu.memory_space<vmem>>, vector<16x128xf32>
    %c0_6 = arith.constant 0 : index
    %c0_7 = arith.constant 0 : index
    %6 = vector.load %arg5[%c0_6, %c0_7] : memref<16x128xf32, #tpu.memory_space<vmem>>, vector<16x128xf32>
    %7 = arith.subf %3, %5 : vector<16x128xf32>
    %8 = math.absf %7 : vector<16x128xf32>
    %9 = arith.mulf %8, %6 : vector<16x128xf32>
    %10 = arith.addf %7, %9 : vector<16x128xf32>
    %11 = math.absf %10 : vector<16x128xf32>
    %cst = arith.constant 9.765625E-4 : f32
    %cst_8 = arith.constant 1.000000e+00 : f32
    %12 = vector.broadcast %cst : f32 to vector<16x128xf32>
    %13 = arith.maximumf %12, %11 : vector<16x128xf32>
    %14 = vector.broadcast %cst_8 : f32 to vector<16x128xf32>
    %15 = arith.minimumf %14, %13 : vector<16x128xf32>
    %16 = arith.subf %4, %5 : vector<16x128xf32>
    %17 = math.absf %16 : vector<16x128xf32>
    %cst_9 = arith.constant 9.765625E-4 : f32
    %cst_10 = arith.constant 1.000000e+00 : f32
    %18 = vector.broadcast %cst_9 : f32 to vector<16x128xf32>
    %19 = arith.maximumf %18, %17 : vector<16x128xf32>
    %20 = vector.broadcast %cst_10 : f32 to vector<16x128xf32>
    %21 = arith.minimumf %20, %19 : vector<16x128xf32>
    %c0_11 = arith.constant 0 : index
    %c0_12 = arith.constant 0 : index
    %22 = vector.load %arg7[%c0_11, %c0_12] : memref<8x128xf32, #tpu.memory_space<vmem>>, vector<8x128xf32>
    %23 = vector.shape_cast %15 : vector<16x128xf32> to vector<2x8x128xf32>
    %cst_13 = arith.constant dense<0.000000e+00> : vector<8x128xf32>
    %24 = vector.multi_reduction <add>, %23, %cst_13 [0] : vector<2x8x128xf32> to vector<8x128xf32>
    %25 = arith.addf %22, %24 : vector<8x128xf32>
    %c0_14 = arith.constant 0 : index
    %c0_15 = arith.constant 0 : index
    %26 = vector.load %arg7[%c0_14, %c0_15] : memref<8x128xf32, #tpu.memory_space<vmem>>, vector<8x128xf32>
    tpu.vector_store %arg7[%c0_14, %c0_15], %25 {strides = array<i32>} : memref<8x128xf32, #tpu.memory_space<vmem>>, vector<8x128xf32>,
    %c0_16 = arith.constant 0 : index
    %c0_17 = arith.constant 0 : index
    %27 = vector.load %arg8[%c0_16, %c0_17] : memref<8x128xf32, #tpu.memory_space<vmem>>, vector<8x128xf32>
    %28 = vector.shape_cast %21 : vector<16x128xf32> to vector<2x8x128xf32>
    %cst_18 = arith.constant dense<0.000000e+00> : vector<8x128xf32>
    %29 = vector.multi_reduction <add>, %28, %cst_18 [0] : vector<2x8x128xf32> to vector<8x128xf32>
    %30 = arith.addf %27, %29 : vector<8x128xf32>
    %c0_19 = arith.constant 0 : index
    %c0_20 = arith.constant 0 : index
    %31 = vector.load %arg8[%c0_19, %c0_20] : memref<8x128xf32, #tpu.memory_space<vmem>>, vector<8x128xf32>
    tpu.vector_store %arg8[%c0_19, %c0_20], %30 {strides = array<i32>} : memref<8x128xf32, #tpu.memory_space<vmem>>, vector<8x128xf32>,
    %c0_i32_21 = arith.constant 0 : i32
    %32 = arith.cmpi eq, %arg1, %c0_i32_21 : i32
    %33 = arith.extui %32 : i1 to i32
    %c0_i32_22 = arith.constant 0 : i32
    %34 = arith.cmpi ne, %33, %c0_i32_22 : i32
    scf.if %34 {
      %c0_23 = arith.constant 0 : index
      %c0_24 = arith.constant 0 : index
      %35 = vector.load %arg7[%c0_23, %c0_24] : memref<8x128xf32, #tpu.memory_space<vmem>>, vector<8x128xf32>
      %c0_25 = arith.constant 0 : index
      %c0_26 = arith.constant 0 : index
      %c0_27 = arith.constant 0 : index
      %c0_28 = arith.constant 0 : index
      %36 = vector.load %arg6[%c0_25, %c0_26, %c0_27, %c0_28] : memref<1x2x8x128xf32, #tpu.memory_space<vmem>>, vector<1x1x8x128xf32>
      %37 = vector.shape_cast %36 : vector<1x1x8x128xf32> to vector<8x128xf32>
      %38 = vector.shape_cast %35 : vector<8x128xf32> to vector<1x1x8x128xf32>
      tpu.vector_store %arg6[%c0_25, %c0_26, %c0_27, %c0_28], %38 {strides = array<i32>} : memref<1x2x8x128xf32, #tpu.memory_space<vmem>>, vector<1x1x8x128xf32>,
      %c0_29 = arith.constant 0 : index
      %c0_30 = arith.constant 0 : index
      %39 = vector.load %arg8[%c0_29, %c0_30] : memref<8x128xf32, #tpu.memory_space<vmem>>, vector<8x128xf32>
      %c0_31 = arith.constant 0 : index
      %c1 = arith.constant 1 : index
      %c0_32 = arith.constant 0 : index
      %c0_33 = arith.constant 0 : index
      %40 = vector.load %arg6[%c0_31, %c1, %c0_32, %c0_33] : memref<1x2x8x128xf32, #tpu.memory_space<vmem>>, vector<1x1x8x128xf32>
      %41 = vector.shape_cast %40 : vector<1x1x8x128xf32> to vector<8x128xf32>
      %42 = vector.shape_cast %39 : vector<8x128xf32> to vector<1x1x8x128xf32>
      tpu.vector_store %arg6[%c0_31, %c1, %c0_32, %c0_33], %42 {strides = array<i32>} : memref<1x2x8x128xf32, #tpu.memory_space<vmem>>, vector<1x1x8x128xf32>,
    } else {
    }
    return
  }
  func.func @transform_0(%arg0: i32, %arg1: i32) -> (i32, i32) {
    %c1_i32 = arith.constant 1 : i32
    %0 = arith.muli %arg0, %c1_i32 : i32
    %1 = arith.addi %0, %arg1 : i32
    %c0_i32 = arith.constant 0 : i32
    %c0_i32_0 = arith.constant 0 : i32
    return %1, %c0_i32 : i32, i32
  }
  func.func @transform_1(%arg0: i32, %arg1: i32) -> (i32, i32) {
    %c1_i32 = arith.constant 1 : i32
    %0 = arith.muli %arg0, %c1_i32 : i32
    %1 = arith.addi %0, %arg1 : i32
    %c0_i32 = arith.constant 0 : i32
    %c0_i32_0 = arith.constant 0 : i32
    return %1, %c0_i32 : i32, i32
  }
  func.func @transform_2(%arg0: i32, %arg1: i32) -> (i32, i32) {
    %c1_i32 = arith.constant 1 : i32
    %0 = arith.muli %arg0, %c1_i32 : i32
    %1 = arith.addi %0, %arg1 : i32
    %c0_i32 = arith.constant 0 : i32
    %c0_i32_0 = arith.constant 0 : i32
    return %1, %c0_i32 : i32, i32
  }
  func.func @transform_3(%arg0: i32, %arg1: i32) -> (i32, i32) {
    %c1_i32 = arith.constant 1 : i32
    %0 = arith.muli %arg0, %c1_i32 : i32
    %1 = arith.addi %0, %arg1 : i32
    %c0_i32 = arith.constant 0 : i32
    %c0_i32_0 = arith.constant 0 : i32
    return %1, %c0_i32 : i32, i32
  }
  func.func @transform_4(%arg0: i32, %arg1: i32) -> (i32, i32, i32, i32) {
    %c0_i32 = arith.constant 0 : i32
    %c0_i32_0 = arith.constant 0 : i32
    %c0_i32_1 = arith.constant 0 : i32
    %c0_i32_2 = arith.constant 0 : i32
    return %arg0, %c0_i32, %c0_i32_0, %c0_i32_1 : i32, i32, i32, i32
  }
}

</mosaic_0001>

<llo_original>
// kernel: ssl1_loss_train_pallas.1
$region0: #{ssl1_loss_train_pallas.1}
  #allocation0 [shape = 'u32[]', space=smem, size = 0x4, offset = 0x4, fixed_abs, tag = 'smem constant byte address 0x4 - core index']
  #allocation1 [shape = 'u32[72,128]{1,0:T(1,128)}', space=vmem, size = 0x9000, scoped, tag = 'internal scratch']
  #allocation2 [shape = 'f32[8,128]{1,0:T(8,128)}', space=vmem, size = 0x1000, scoped, tag = 'scratch operand']
  #allocation3 [shape = 'f32[8,128]{1,0:T(8,128)}', space=vmem, size = 0x1000, scoped, tag = 'scratch operand']
  %s0 = inlined_call_operand.vmem [shape: f32[16,128], index: 0, kind: input, shape index: {}]
  %s1 = inlined_call_operand.vmem [shape: f32[16,128], index: 1, kind: input, shape index: {}]
  %s2 = inlined_call_operand.vmem [shape: f32[16,128], index: 2, kind: input, shape index: {}]
  %s3 = inlined_call_operand.vmem [shape: f32[16,128], index: 3, kind: input, shape index: {}]
  %s4 = inlined_call_operand.vmem [shape: f32[1,2,8,128], index: 4, kind: output, shape index: {}]
  %s5 = sld [smem:[#allocation0]]
  $region34: #{ssl1_loss_train_pallas.1} parent=0
    _
  %s7 = ssub.s32 1, %s5
  %s8 = scalar_select 0, %s7, %s5
  // Predicated region
  $region2: #{ssl1_loss_train_pallas.1} parent=0 // pred_check
    _
  $region3: #{ssl1_loss_train_pallas.1} parent=0 // pred_check_branch
    %10 = sbr.rel (0) target = $region5
  $region4: #{ssl1_loss_train_pallas.1} parent=0 // pred_region
    %s11 = sadd.s32 0, 0
    %s12 = smul.u32 2, %s11
    %p13 = scmp.lt.s32.totalorder %s12, 1
    %s14 = scalar_select %p13, %s12, 1
    %s15 = smul.addr %s14, 8
    %s16 = scalar_lea.vmem %s0, %s15
    %s17 = sadd.s32 0, 0
    %s18 = smul.u32 2, %s17
  $region5: #{ssl1_loss_train_pallas.1} parent=0 // pred_fallthru
    _
  // Predicated region
  $region6: #{ssl1_loss_train_pallas.1} parent=0 // pred_check
    _
  $region7: #{ssl1_loss_train_pallas.1} parent=0 // pred_check_branch
    %20 = sbr.rel (0) target = $region9
  $region8: #{ssl1_loss_train_pallas.1} parent=0 // pred_region
    %s21 = sadd.s32 0, 0
    %s22 = smul.u32 2, %s21
    %p23 = scmp.lt.s32.totalorder %s22, 1
    %s24 = scalar_select %p23, %s22, 1
    %s25 = smul.addr %s24, 8
    %s26 = scalar_lea.vmem %s1, %s25
    %s27 = sadd.s32 0, 0
    %s28 = smul.u32 2, %s27
  $region9: #{ssl1_loss_train_pallas.1} parent=0 // pred_fallthru
    _
  // Predicated region
  $region10: #{ssl1_loss_train_pallas.1} parent=0 // pred_check
    _
  $region11: #{ssl1_loss_train_pallas.1} parent=0 // pred_check_branch
    %30 = sbr.rel (0) target = $region13
  $region12: #{ssl1_loss_train_pallas.1} parent=0 // pred_region
    %s31 = sadd.s32 0, 0
    %s32 = smul.u32 2, %s31
    %p33 = scmp.lt.s32.totalorder %s32, 1
    %s34 = scalar_select %p33, %s32, 1
    %s35 = smul.addr %s34, 8
    %s36 = scalar_lea.vmem %s2, %s35
    %s37 = sadd.s32 0, 0
    %s38 = smul.u32 2, %s37
  $region13: #{ssl1_loss_train_pallas.1} parent=0 // pred_fallthru
    _
  // Predicated region
  $region14: #{ssl1_loss_train_pallas.1} parent=0 // pred_check
    _
  $region15: #{ssl1_loss_train_pallas.1} parent=0 // pred_check_branch
    %40 = sbr.rel (0) target = $region17
  $region16: #{ssl1_loss_train_pallas.1} parent=0 // pred_region
    %s41 = sadd.s32 0, 0
    %s42 = smul.u32 2, %s41
    %p43 = scmp.lt.s32.totalorder %s42, 1
    %s44 = scalar_select %p43, %s42, 1
    %s45 = smul.addr %s44, 8
    %s46 = scalar_lea.vmem %s3, %s45
    %s47 = sadd.s32 0, 0
    %s48 = smul.u32 2, %s47
  $region17: #{ssl1_loss_train_pallas.1} parent=0 // pred_fallthru
    _
  %s49 = sadd.s32 0, 0
  %s50 = smul.u32 2, %s49
  %p51 = scmp.lt.s32.totalorder %s50, 1
  %s52 = scalar_select %p51, %s50, 1
  %s53 = smul.addr %s52, 8
  %s54 = scalar_lea.vmem %s0, %s53
  %s55 = sadd.s32 0, 0
  %s56 = smul.u32 2, %s55
  %p57 = scmp.lt.s32.totalorder %s56, 1
  %s58 = scalar_select %p57, %s56, 1
  %s59 = smul.addr %s58, 8
  %s60 = scalar_lea.vmem %s1, %s59
  %s61 = sadd.s32 0, 0
  %s62 = smul.u32 2, %s61
  %p63 = scmp.lt.s32.totalorder %s62, 1
  %s64 = scalar_select %p63, %s62, 1
  %s65 = smul.addr %s64, 8
  %s66 = scalar_lea.vmem %s2, %s65
  %s67 = sadd.s32 0, 0
  %s68 = smul.u32 2, %s67
  %p69 = scmp.lt.s32.totalorder %s68, 1
  %s70 = scalar_select %p69, %s68, 1
  %s71 = smul.addr %s70, 8
  %s72 = scalar_lea.vmem %s3, %s71
  %s73 = sadd.s32 0, 0
  %s74 = smul.u32 2, %s73
  %p75 = scmp.lt.s32.totalorder %s74, 1
  %s76 = scalar_select %p75, %s74, 1
  %s77 = smul.addr %s76, 8
  %s78 = scalar_lea.vmem %s0, %s77
  %s79 = sadd.s32 0, 0
  %s80 = smul.u32 2, %s79
  %s81 = sadd.s32 0, 0
  %s82 = smul.u32 2, %s81
  %p83 = scmp.lt.s32.totalorder %s82, 1
  %s84 = scalar_select %p83, %s82, 1
  %s85 = smul.addr %s84, 8
  %s86 = scalar_lea.vmem %s1, %s85
  %s87 = sadd.s32 0, 0
  %s88 = smul.u32 2, %s87
  %s89 = sadd.s32 0, 0
  %s90 = smul.u32 2, %s89
  %p91 = scmp.lt.s32.totalorder %s90, 1
  %s92 = scalar_select %p91, %s90, 1
  %s93 = smul.addr %s92, 8
  %s94 = scalar_lea.vmem %s2, %s93
  %s95 = sadd.s32 0, 0
  %s96 = smul.u32 2, %s95
  %s97 = sadd.s32 0, 0
  %s98 = smul.u32 2, %s97
  %p99 = scmp.lt.s32.totalorder %s98, 1
  %s100 = scalar_select %p99, %s98, 1
  %s101 = smul.addr %s100, 8
  %s102 = scalar_lea.vmem %s3, %s101
  %s103 = sadd.s32 0, 0
  %s104 = smul.u32 2, %s103
  %p105 = scmp.eq.s32.totalorder 0, 0
  // Predicated region
  $region18: #{ssl1_loss_train_pallas.1} parent=0 // pred_check
    %p106 = pneg %p105
  $region19: #{ssl1_loss_train_pallas.1} parent=0 // pred_check_branch
    %108 = sbr.rel (%p106) target = $region21
  $region20: #{ssl1_loss_train_pallas.1} parent=0 // pred_region
    %109 = vst [vmem:[#allocation2] sm:$0xff] 0.0
    %110 = vst [vmem:[#allocation3] sm:$0xff] 0.0
  $region21: #{ssl1_loss_train_pallas.1} parent=0 // pred_fallthru
    _
  %v111 = vld [vmem:[%s78] sm:$0xff]
  %v112 = vld [vmem:[%s78 + $0x8] sm:$0xff]
  %v113 = vld [vmem:[%s86] sm:$0xff]
  %v114 = vld [vmem:[%s86 + $0x8] sm:$0xff]
  %v115 = vld [vmem:[%s94] sm:$0xff]
  %v116 = vld [vmem:[%s94 + $0x8] sm:$0xff]
  %v117 = vld [vmem:[%s102] sm:$0xff]
  %v118 = vld [vmem:[%s102 + $0x8] sm:$0xff]
  %v119 = vsub.f32 %v111, %v115
  %v120 = vsub.f32 %v112, %v116
  %v121 = vand.u32 2147483647, %v119
  %v122 = vand.u32 2147483647, %v120
  %v123 = vmul.f32 %v121, %v117
  %v124 = vmul.f32 %v122, %v118
  %v125 = vadd.f32 %v119, %v123
  %v126 = vadd.f32 %v120, %v124
  %v127 = vand.u32 2147483647, %v125
  %v128 = vand.u32 2147483647, %v126
  %v129 = vmax.f32 %v127, 0.0009765625
  %v130 = vmax.f32 %v128, 0.0009765625
  %v131 = vmin.f32 %v129, 1.0
  %v132 = vmin.f32 %v130, 1.0
  %v133 = vsub.f32 %v113, %v115
  %v134 = vsub.f32 %v114, %v116
  %v135 = vand.u32 2147483647, %v133
  %v136 = vand.u32 2147483647, %v134
  %v137 = vmax.f32 %v135, 0.0009765625
  %v138 = vmax.f32 %v136, 0.0009765625
  %v139 = vmin.f32 %v137, 1.0
  %v140 = vmin.f32 %v138, 1.0
  %v141 = vld [vmem:[#allocation2] sm:$0xff]
  %v142 = vadd.f32 %v131, %v132
  %v143 = vadd.f32 %v141, %v142
  %144 = vst [vmem:[#allocation2] sm:$0xff] %v143
  %v145 = vld [vmem:[#allocation3] sm:$0xff]
  %v146 = vadd.f32 %v139, %v140
  %v147 = vadd.f32 %v145, %v146
  %148 = vst [vmem:[#allocation3] sm:$0xff] %v147
  // Predicated region
  $region22: #{ssl1_loss_train_pallas.1} parent=0 // pred_check
    %p149 = pneg %p105
  $region23: #{ssl1_loss_train_pallas.1} parent=0 // pred_check_branch
    %151 = sbr.rel (%p149) target = $region25
  $region24: #{ssl1_loss_train_pallas.1} parent=0 // pred_region
    %v152 = vld [vmem:[#allocation2] sm:$0xff]
    %153 = vst [vmem:[%s4] sm:$0xff] %v152
    %v154 = vld [vmem:[#allocation3] sm:$0xff]
    %s155 = scalar_lea.vmem %s4, 8
    %156 = vst [vmem:[%s155] sm:$0xff] %v154
  $region25: #{ssl1_loss_train_pallas.1} parent=0 // pred_fallthru
    _
  // Predicated region
  $region26: #{ssl1_loss_train_pallas.1} parent=0 // pred_check
    _
  $region27: #{ssl1_loss_train_pallas.1} parent=0 // pred_check_branch
    %158 = sbr.rel (0) target = $region29
  $region28: #{ssl1_loss_train_pallas.1} parent=0 // pred_region
    _
  $region29: #{ssl1_loss_train_pallas.1} parent=0 // pred_fallthru
    _
  // Predicated region
  $region30: #{ssl1_loss_train_pallas.1} parent=0 // pred_check
    _
  $region31: #{ssl1_loss_train_pallas.1} parent=0 // pred_check_branch
    %160 = sbr.rel (0) target = $region33
  $region32: #{ssl1_loss_train_pallas.1} parent=0 // pred_region
    _
  $region33: #{ssl1_loss_train_pallas.1} parent=0 // pred_fallthru
    _

</llo_original>
